<compile_context>
chip_gen: v7x
topology: tpu7x:2x2x1
jax: 0.10.0
libtpu: 0.0.40
codegen_flags: <defaults>
</compile_context>

<pallas_src>
import functools

import jax
import jax.numpy as jnp
from jax import lax
from jax.experimental import pallas as pl
from jax.experimental.pallas import tpu as pltpu

_MIB = 1024 * 1024


# ----------------------------------------------------------------------------
# Per-chip sizing heuristics
# ----------------------------------------------------------------------------
def _round_up(x, m):
    return -(-x // m) * m


def _vmem_budgets():
    """(input double-buffer budget, scoped VMEM limit) from the chip's VMEM size."""
    try:
        cap = int(pltpu.get_tpu_info().vmem_capacity_bytes)
    except Exception:  # query unavailable -> conservative (v7x-safe) defaults
        cap = 64 * _MIB
    if cap >= 100 * _MIB:              # v5e / v6e: 128 MiB physical VMEM
        return 24 * _MIB, 80 * _MIB
    return 12 * _MIB, 48 * _MIB        # v7x: 64 MiB physical VMEM


def _choose_tk(HW, C, itemsize, x_tile_budget, max_tk=16384):
    """Widest lane-multiple HW tile whose double-buffered (C, tk) copy fits budget."""
    cap = x_tile_budget // (2 * C * itemsize)
    cap = max(128, (cap // 128) * 128)
    hw_cap = _round_up(max(HW, 1), 128)
    return max(128, min(max_tk, cap, hw_cap))


def _choose_splits(total_tiles, requested):
    """Largest split count <= requested that divides the HW tile count."""
    s = max(1, min(requested, total_tiles))
    while s > 1 and total_tiles % s != 0:
        s -= 1
    return s


# ----------------------------------------------------------------------------
# Kernels
# ----------------------------------------------------------------------------
def _gram_partial_kernel(x_ref, g_ref, *, tk, tiles_per_split, HW, precision):
    """Accumulate one split's partial (unnormalized) gram X_s @ X_s^T over HW tiles.

    Grid: (splits, tiles_per_split) -- ("parallel", "arbitrary").
    g_ref's block index is constant over k, so it stays resident and we
    accumulate into it directly (no scratch, no final copy).
    """
    k = pl.program_id(1)

    @pl.when(k == 0)
    def _():
        g_ref[...] = jnp.zeros_like(g_ref)

    xk = x_ref[...]                                   # (C, tk), native dtype
    if HW % tk != 0:
        # The last global HW tile is partial; its trailing lanes hold
        # unspecified data, so zero them (zero columns don't change X @ X^T).
        s = pl.program_id(0)
        rem = HW - (s * tiles_per_split + k) * tk     # > tk for all full tiles
        lane = lax.broadcasted_iota(jnp.int32, (1, tk), 1)
        xk = jnp.where(lane < rem, xk, jnp.zeros_like(xk))

    # Contract on the lane (HW) axis of BOTH operands: xk @ xk^T on the MXU
    # without materializing a transpose; accumulate in f32.
    g_ref[...] += lax.dot_general(
        xk, xk,
        dimension_numbers=(((1,), (1,)), ((), ())),
        preferred_element_type=jnp.float32,
        precision=precision)


def _combine_gram_kernel(parts_ref, g_ref, *, inv_numel):
    """Sum partial grams over splits and normalize -> (C, C) gram."""
    g_ref[...] = jnp.sum(parts_ref[...], axis=0) * inv_numel


def _combine_mse_kernel(parts_ref, t_ref, out_ref, *, inv_numel, inv_cc):
    """Fused: sum partial grams, normalize, MSE against the target gram."""
    g = jnp.sum(parts_ref[...], axis=0) * inv_numel
    d = g - t_ref[...].astype(jnp.float32)
    out_ref[0, 0] = jnp.sum(d * d) * inv_cc


# ----------------------------------------------------------------------------
# Wrappers
# ----------------------------------------------------------------------------
def _prep_inputs(x_nchw, tk, compute_dtype):
    N, C, H, W = x_nchw.shape
    assert N == 1, "StyleScore.gram requires batch size 1"
    HW = H * W
    x2d = x_nchw.reshape(C, HW)
    if compute_dtype is not None and x2d.dtype != compute_dtype:
        # Explicit numerics trade-off (e.g. bf16 halves HBM traffic).
        x2d = x2d.astype(compute_dtype)
    itemsize = jnp.dtype(x2d.dtype).itemsize
    x_budget, vmem_limit = _vmem_budgets()
    if tk is None:
        tk = _choose_tk(HW, C, itemsize, x_budget)
    tk = max(128, (tk // 128) * 128)                  # lane multiple
    precision = (lax.Precision.HIGHEST
                 if x2d.dtype == jnp.float32 else lax.Precision.DEFAULT)
    return x2d, C, HW, tk, vmem_limit, precision


def _gram_partials(x2d, *, tk, hw_splits, vmem_limit_bytes, precision):
    """(splits, C, C) float32 unnormalized partial grams over disjoint HW ranges."""
    C, HW = x2d.shape
    total_tiles = pl.cdiv(HW, tk)
    splits = _choose_splits(total_tiles, hw_splits)
    tiles_per_split = total_tiles // splits

    kernel = functools.partial(
        _gram_partial_kernel, tk=tk, tiles_per_split=tiles_per_split, HW=HW,
        precision=precision)

    return pl.pallas_call(
        kernel,
        out_shape=jax.ShapeDtypeStruct((splits, C, C), jnp.float32),
        grid=(splits, tiles_per_split),
        in_specs=[pl.BlockSpec((C, tk),
                               lambda s, k: (0, s * tiles_per_split + k))],
        out_specs=pl.BlockSpec((None, C, C), lambda s, k: (s, 0, 0)),
        compiler_params=pltpu.CompilerParams(
            dimension_semantics=("parallel", "arbitrary"),
            vmem_limit_bytes=vmem_limit_bytes),
    )(x2d)


def gram_pallas(x_nchw, *, tk=None, hw_splits=2, compute_dtype=None):
    """Pallas gram matrix: (1, C, H, W) -> (C, C) float32 == X @ X^T / (C*H*W)."""
    x2d, C, HW, tk, vmem_limit, precision = _prep_inputs(x_nchw, tk, compute_dtype)
    parts = _gram_partials(x2d, tk=tk, hw_splits=hw_splits,
                           vmem_limit_bytes=vmem_limit, precision=precision)
    kernel = functools.partial(_combine_gram_kernel,
                               inv_numel=1.0 / float(C * HW))
    # Whole-array blocks: fine for style-transfer C (<= a few K).
    # TODO(synk): tile the combine kernels for very large C (whole (S,C,C) in VMEM).
    return pl.pallas_call(
        kernel,
        out_shape=jax.ShapeDtypeStruct((C, C), jnp.float32),
    )(parts)


def style_score_pallas(x_nchw, target_gram, *, tk=None, hw_splits=2,
                       compute_dtype=None):
    """Forward pass of StyleScore: returns (x, score).

    score == mse_loss(gram(x), target_gram); x is passed through unchanged
    (the PyTorch module stores `self.score` as a side effect and returns x).
    """
    x2d, C, HW, tk, vmem_limit, precision = _prep_inputs(x_nchw, tk, compute_dtype)
    parts = _gram_partials(x2d, tk=tk, hw_splits=hw_splits,
                           vmem_limit_bytes=vmem_limit, precision=precision)
    kernel = functools.partial(
        _combine_mse_kernel,
        inv_numel=1.0 / float(C * HW),
        inv_cc=1.0 / float(C * C))
    score = pl.pallas_call(
        kernel,
        out_shape=jax.ShapeDtypeStruct((1, 1), jnp.float32),
    )(parts, target_gram)
    return x_nchw, score[0, 0]


# ----------------------------------------------------------------------------
# Pure-JAX reference (for correctness check)
# ----------------------------------------------------------------------------
def _gram_ref(x_nchw):
    N, C, H, W = x_nchw.shape
    x2d = x_nchw.reshape(C, H * W).astype(jnp.float32)
    g = jnp.matmul(x2d, x2d.T, precision=lax.Precision.HIGHEST)
    return g / (C * H * W)


def _score_ref(x_nchw, target_gram):
    return jnp.mean((_gram_ref(x_nchw) - target_gram) ** 2)


# ----------------------------------------------------------------------------
# Main
# ----------------------------------------------------------------------------
if __name__ == "__main__":
    key = jax.random.PRNGKey(0)
    keys = jax.random.split(key, 6)

    def check(target_img, x, **kw):
        # __init__: precompute the target gram (Pallas), forward: score + passthrough.
        tg = jax.block_until_ready(gram_pallas(target_img, **kw))
        x_out, score = style_score_pallas(x, tg, **kw)
        x_out = jax.block_until_ready(x_out)
        score = jax.block_until_ready(score)

        tg_ref = _gram_ref(target_img)
        assert jnp.allclose(tg, tg_ref, rtol=1e-5, atol=1e-5), "gram mismatch"
        assert jnp.allclose(score, _score_ref(x, tg_ref),
                            rtol=1e-5, atol=1e-6), "score mismatch"
        assert x_out.shape == x.shape and jnp.allclose(x_out, x), "passthrough"

    # Case 1: tiny module-consistent shape; single HW tile, no masking needed.
    t1 = jax.random.normal(keys[0], (1, 4, 16, 16), jnp.float32)
    x1 = jax.random.normal(keys[1], (1, 4, 16, 16), jnp.float32)
    check(t1, x1)

    # Case 2: HW = 400 (not a multiple of 128) -> exercises the in-kernel
    # partial-tile mask that replaced the old host-side jnp.pad.
    t2 = jax.random.normal(keys[2], (1, 16, 20, 20), jnp.float32)
    x2 = jax.random.normal(keys[3], (1, 16, 20, 20), jnp.float32)
    check(t2, x2)

    # Case 3: forced small tk -> 10 HW tiles, 2-way HW ("parallel") split with
    # partial grams (the v7x dual-TensorCore path) and a partial last tile.
    t3 = jax.random.normal(keys[4], (1, 16, 30, 40), jnp.float32)
    x3 = jax.random.normal(keys[5], (1, 16, 30, 40), jnp.float32)
    check(t3, x3, tk=128, hw_splits=2)

    print("KERNEL_OK")
</pallas_src>

<mosaic_0001>
module attributes {stable_mosaic.version = 11 : i64} {
  func.func @_gram_partial_kernel(%arg0: i32, %arg1: i32, %arg2: memref<4x256xf32, #tpu.memory_space<vmem>>, %arg3: memref<1x4x4xf32, #tpu.memory_space<vmem>>) attributes {dimension_semantics = [#tpu.dimension_semantics<parallel>, #tpu.dimension_semantics<arbitrary>], iteration_bounds = array<i64: 1, 1>, scalar_prefetch = 0 : i64, scratch_operands = 0 : i64, tpu.core_type = #tpu.core_type<tc>, window_params = [{transform_indices = @transform_0, window_bounds = array<i64: 4, 256>}, {transform_indices = @transform_1, window_bounds = array<i64: 1, 4, 4>}]} {
    %c0_i32 = arith.constant 0 : i32
    %0 = arith.cmpi eq, %arg1, %c0_i32 : i32
    %1 = arith.extui %0 : i1 to i32
    %c0_i32_0 = arith.constant 0 : i32
    %2 = arith.cmpi ne, %1, %c0_i32_0 : i32
    scf.if %2 {
      %cst_8 = arith.constant 0.000000e+00 : f32
      %11 = vector.broadcast %cst_8 : f32 to vector<4x4xf32>
      %c0_9 = arith.constant 0 : index
      %c0_10 = arith.constant 0 : index
      %c0_11 = arith.constant 0 : index
      %12 = vector.load %arg3[%c0_9, %c0_10, %c0_11] : memref<1x4x4xf32, #tpu.memory_space<vmem>>, vector<1x4x4xf32>
      %13 = vector.shape_cast %12 : vector<1x4x4xf32> to vector<4x4xf32>
      %14 = vector.shape_cast %11 : vector<4x4xf32> to vector<1x4x4xf32>
      tpu.vector_store %arg3[%c0_9, %c0_10, %c0_11], %14 {strides = array<i32>} : memref<1x4x4xf32, #tpu.memory_space<vmem>>, vector<1x4x4xf32>,
    } else {
    }
    %c0 = arith.constant 0 : index
    %c0_1 = arith.constant 0 : index
    %3 = vector.load %arg2[%c0, %c0_1] : memref<4x256xf32, #tpu.memory_space<vmem>>, vector<4x256xf32>
    %c0_2 = arith.constant 0 : index
    %c0_3 = arith.constant 0 : index
    %c0_4 = arith.constant 0 : index
    %4 = vector.load %arg3[%c0_2, %c0_3, %c0_4] : memref<1x4x4xf32, #tpu.memory_space<vmem>>, vector<1x4x4xf32>
    %5 = vector.shape_cast %4 : vector<1x4x4xf32> to vector<4x4xf32>
    %cst = arith.constant dense<0.000000e+00> : vector<4x4xf32>
    %6 = tpu.matmul %3, %3, %cst {dimension_numbers = #tpu.dot_dimension_numbers<[1], [1], [0], [0], [0, 0, 1, 0], [], []>, precision = #tpu.contract_precision<fp32>} : vector<4x256xf32>, vector<4x256xf32>, vector<4x4xf32> -> vector<4x4xf32>
    %7 = arith.addf %5, %6 : vector<4x4xf32>
    %c0_5 = arith.constant 0 : index
    %c0_6 = arith.constant 0 : index
    %c0_7 = arith.constant 0 : index
    %8 = vector.load %arg3[%c0_5, %c0_6, %c0_7] : memref<1x4x4xf32, #tpu.memory_space<vmem>>, vector<1x4x4xf32>
    %9 = vector.shape_cast %8 : vector<1x4x4xf32> to vector<4x4xf32>
    %10 = vector.shape_cast %7 : vector<4x4xf32> to vector<1x4x4xf32>
    tpu.vector_store %arg3[%c0_5, %c0_6, %c0_7], %10 {strides = array<i32>} : memref<1x4x4xf32, #tpu.memory_space<vmem>>, vector<1x4x4xf32>,
    return
  }
  func.func @transform_0(%arg0: i32, %arg1: i32) -> (i32, i32) {
    %c1_i32 = arith.constant 1 : i32
    %0 = arith.muli %arg0, %c1_i32 : i32
    %1 = arith.addi %0, %arg1 : i32
    %c0_i32 = arith.constant 0 : i32
    %c0_i32_0 = arith.constant 0 : i32
    return %c0_i32, %1 : i32, i32
  }
  func.func @transform_1(%arg0: i32, %arg1: i32) -> (i32, i32, i32) {
    %c0_i32 = arith.constant 0 : i32
    %c0_i32_0 = arith.constant 0 : i32
    %c0_i32_1 = arith.constant 0 : i32
    return %arg0, %c0_i32, %c0_i32_0 : i32, i32, i32
  }
}

</mosaic_0001>

<llo_original>
// kernel: tpu_custom_call.1
$region0: #{tpu_custom_call.1}
  #allocation0 [shape = 'u32[]', space=smem, size = 0x4, offset = 0x4, fixed_abs, tag = 'smem constant byte address 0x4 - core index']
  #allocation1 [shape = 'u32[144,128]{1,0:T(1,128)}', space=vmem, size = 0x12000, scoped, tag = 'internal scratch']
  %s0 = inlined_call_operand.hbm [shape: f32[4,256], index: 0, kind: input, shape index: {}]
  %s1 = inlined_call_operand.hbm [shape: f32[1,4,4], index: 1, kind: output, shape index: {}]
  %s2 = sld [smem:[#allocation0]]
  $region22: #{tpu_custom_call.1} parent=0
    _
  %s4 = ssub.s32 1, %s2
  %s5 = scalar_select 0, %s4, %s2
  $region1: #{tpu_custom_call.1} parent=0
    #allocation2 [shape = 'u8[4096]{0}', space=vmem, size = 0x1000, scoped, tag = 'input window, operand 0, single buffered']
    #allocation3 [shape = 's32[1]{0}', space=sflag, size = 0x4, scoped, tag = 'scoped memory for tpu_custom_call.1']
    #allocation4 [shape = 's32[1]{0}', space=sflag, size = 0x4, scoped, tag = 'scoped memory for tpu_custom_call.1']
    #allocation5 [shape = 'u8[2048]{0}', space=vmem, size = 0x800, scoped, tag = 'output window, operand 0, single buffered']
    %6 = vsyncpa [#allocation3], 0
    %7 = vsyncpa [#allocation4], 0
    // Predicated region
    $region2: #{tpu_custom_call.1} parent=1 // pred_check
      _
    $region3: #{tpu_custom_call.1} parent=1 // pred_check_branch
      %9 = sbr.rel (0) target = $region5
    $region4: #{tpu_custom_call.1} parent=1 // pred_region
      %s10 = sadd.s32 0, 0
      %s11 = smul.u32 2, %s10
      %s13 = ssub.s32 128, 128
      %14 = vsyncadd [#allocation3], %s13
      %s15 = smul.addr %s11, 64
      %s16 = scalar_lea.hbm %s0, %s15
      %s18 = sshll.u32 [#allocation2], 4
      %s19 = int_to_ptr.vmem [resolvable:$true] %s18
      %21 = dma.hbm_to_vmem [thread:$0]  %s16, 128, %s19, [#allocation3]
    $region5: #{tpu_custom_call.1} parent=1 // pred_fallthru
      _
    // Predicated region
    $region6: #{tpu_custom_call.1} parent=1 // pred_check
      _
    $region7: #{tpu_custom_call.1} parent=1 // pred_check_branch
      %23 = sbr.rel (0) target = $region9
    $region8: #{tpu_custom_call.1} parent=1 // pred_region
      %24 = dma.done [#allocation3], 128
    $region9: #{tpu_custom_call.1} parent=1 // pred_fallthru
      _
    %s25 = sadd.s32 0, 0
    %s26 = smul.u32 2, %s25
    %p27 = scmp.eq.s32.totalorder 0, 0
    // Predicated region
    $region10: #{tpu_custom_call.1} parent=1 // pred_check
      %p28 = pneg %p27
    $region11: #{tpu_custom_call.1} parent=1 // pred_check_branch
      %30 = sbr.rel (%p28) target = $region13
    $region12: #{tpu_custom_call.1} parent=1 // pred_region
      %vm31 = vcmask 27648
      %32 = vst.msk [vmem:[#allocation5] sm:$0xf] %vm31, 0.0
    $region13: #{tpu_custom_call.1} parent=1 // pred_fallthru
      _
    %v33 = vld [vmem:[#allocation2] sm:$0xff]
    %v34 = vld [vmem:[#allocation5] sm:$0xf]
    %v36 = vcombine.high %v33, %v33
    %v38 = vand.u32 %v36, 4294901760
    %39 = vmatprep.subr.mxu0 %v38
    %v40 = vand.u32 %v33, 4294901760
    %41 = vmatpush1.xpose.msra.mxu0 %v40
    %42 = vmatprep.subr.mxu0 0.0
    %43 = vmatpush1.xpose.msra.mxu0 0.0
    %44 = vmatprep.subr.mxu0 0.0
    %45 = vmatpush1.xpose.msra.mxu0 0.0
    %46 = vmatprep.subr.mxu0 0.0
    %47 = vmatpush1.xpose.msra.mxu0 0.0
    %48 = vmatprep.subr.mxu0 0.0
    %49 = vmatpush1.xpose.msra.mxu0 0.0
    %50 = vmatprep.subr.mxu0 0.0
    %51 = vmatpush1.xpose.msra.mxu0 0.0
    %52 = vmatprep.subr.mxu0 0.0
    %53 = vmatpush1.xpose.msra.mxu0 0.0
    %54 = vmatprep.subr.mxu0 0.0
    %55 = vmatpush1.xpose.msra.mxu0 0.0
    %56 = vmatprep.subr.mxu0 0.0
    %57 = vmatpush1.xpose.msra.mxu0 0.0
    %58 = vmatprep.subr.mxu0 0.0
    %59 = vmatpush1.xpose.msra.mxu0 0.0
    %60 = vmatprep.subr.mxu0 0.0
    %61 = vmatpush1.xpose.msra.mxu0 0.0
    %62 = vmatprep.subr.mxu0 0.0
    %63 = vmatpush1.xpose.msra.mxu0 0.0
    %64 = vmatprep.subr.mxu0 0.0
    %65 = vmatpush1.xpose.msra.mxu0 0.0
    %66 = vmatprep.subr.mxu0 0.0
    %67 = vmatpush1.xpose.msra.mxu0 0.0
    %68 = vmatprep.subr.mxu0 0.0
    %69 = vmatpush1.xpose.msra.mxu0 0.0
    %70 = vmatprep.subr.mxu0 0.0
    %71 = vmatpush1.xpose.msra.mxu0 0.0
    %72 = vmatprep.subr.mxu0 0.0
    %73 = vmatpush1.xpose.msra.mxu0 0.0
    %74 = vmatprep.subr.mxu0 0.0
    %75 = vmatpush1.xpose.msra.mxu0 0.0
    %76 = vmatprep.subr.mxu0 0.0
    %77 = vmatpush1.xpose.msra.mxu0 0.0
    %78 = vmatprep.subr.mxu0 0.0
    %79 = vmatpush1.xpose.msra.mxu0 0.0
    %80 = vmatprep.subr.mxu0 0.0
    %81 = vmatpush1.xpose.msra.mxu0 0.0
    %82 = vmatprep.subr.mxu0 0.0
    %83 = vmatpush1.xpose.msra.mxu0 0.0
    %84 = vmatprep.subr.mxu0 0.0
    %85 = vmatpush1.xpose.msra.mxu0 0.0
    %86 = vmatprep.subr.mxu0 0.0
    %87 = vmatpush1.xpose.msra.mxu0 0.0
    %88 = vmatprep.subr.mxu0 0.0
    %89 = vmatpush1.xpose.msra.mxu0 0.0
    %90 = vmatprep.subr.mxu0 0.0
    %91 = vmatpush1.xpose.msra.mxu0 0.0
    %92 = vmatprep.subr.mxu0 0.0
    %93 = vmatpush1.xpose.msra.mxu0 0.0
    %94 = vmatprep.subr.mxu0 0.0
    %95 = vmatpush1.xpose.msra.mxu0 0.0
    %96 = vmatprep.subr.mxu0 0.0
    %97 = vmatpush1.xpose.msra.mxu0 0.0
    %98 = vmatprep.subr.mxu0 0.0
    %99 = vmatpush1.xpose.msra.mxu0 0.0
    %100 = vmatprep.subr.mxu0 0.0
    %101 = vmatpush1.xpose.msra.mxu0 0.0
    %102 = vmatprep.subr.mxu0 0.0
    %103 = vmatpush1.xpose.msra.mxu0 0.0
    %v104 = vand.u32 %v36, 4294901760
    %v105 = vsub.f32 %v36, %v104
    %v106 = vand.u32 %v105, 4294901760
    %v107 = vsub.f32 %v105, %v106
    %v108 = vand.u32 %v107, 4294901760
    %109 = vmatprep.mubr.f32.mxu0 %v108
    %v110 = vand.u32 %v33, 4294901760
    %v111 = vsub.f32 %v33, %v110
    %v112 = vand.u32 %v111, 4294901760
    %v113 = vsub.f32 %v111, %v112
    %v114 = vand.u32 %v113, 4294901760
    %115 = vmatmul.mubr.f32.gmra.mrb[0].mxu0 %v114
    %v116 = vpop.f32.mrb[0].mxu0
    %v117 = vadd.f32 0.0, %v116
    %v118 = vpop.f32.mrb[0].mxu0
    %119 = vdwg.mxu0
    %v120 = vand.u32 %v36, 4294901760
    %v121 = vsub.f32 %v36, %v120
    %v122 = vand.u32 %v121, 4294901760
    %v123 = vsub.f32 %v121, %v122
    %v124 = vand.u32 %v123, 4294901760
    %125 = vmatprep.subr.mxu0 %v124
    %v126 = vand.u32 %v33, 4294901760
    %v127 = vsub.f32 %v33, %v126
    %v128 = vand.u32 %v127, 4294901760
    %v129 = vsub.f32 %v127, %v128
    %v130 = vand.u32 %v129, 4294901760
    %131 = vmatpush1.xpose.msra.mxu0 %v130
    %132 = vmatprep.subr.mxu0 0.0
    %133 = vmatpush1.xpose.msra.mxu0 0.0
    %134 = vmatprep.subr.mxu0 0.0
    %135 = vmatpush1.xpose.msra.mxu0 0.0
    %136 = vmatprep.subr.mxu0 0.0
    %137 = vmatpush1.xpose.msra.mxu0 0.0
    %138 = vmatprep.subr.mxu0 0.0
    %139 = vmatpush1.xpose.msra.mxu0 0.0
    %140 = vmatprep.subr.mxu0 0.0
    %141 = vmatpush1.xpose.msra.mxu0 0.0
    %142 = vmatprep.subr.mxu0 0.0
    %143 = vmatpush1.xpose.msra.mxu0 0.0
    %144 = vmatprep.subr.mxu0 0.0
    %145 = vmatpush1.xpose.msra.mxu0 0.0
    %146 = vmatprep.subr.mxu0 0.0
    %147 = vmatpush1.xpose.msra.mxu0 0.0
    %148 = vmatprep.subr.mxu0 0.0
    %149 = vmatpush1.xpose.msra.mxu0 0.0
    %150 = vmatprep.subr.mxu0 0.0
    %151 = vmatpush1.xpose.msra.mxu0 0.0
    %152 = vmatprep.subr.mxu0 0.0
    %153 = vmatpush1.xpose.msra.mxu0 0.0
    %154 = vmatprep.subr.mxu0 0.0
    %155 = vmatpush1.xpose.msra.mxu0 0.0
    %156 = vmatprep.subr.mxu0 0.0
    %157 = vmatpush1.xpose.msra.mxu0 0.0
    %158 = vmatprep.subr.mxu0 0.0
    %159 = vmatpush1.xpose.msra.mxu0 0.0
    %160 = vmatprep.subr.mxu0 0.0
    %161 = vmatpush1.xpose.msra.mxu0 0.0
    %162 = vmatprep.subr.mxu0 0.0
    %163 = vmatpush1.xpose.msra.mxu0 0.0
    %164 = vmatprep.subr.mxu0 0.0
    %165 = vmatpush1.xpose.msra.mxu0 0.0
    %166 = vmatprep.subr.mxu0 0.0
    %167 = vmatpush1.xpose.msra.mxu0 0.0
    %168 = vmatprep.subr.mxu0 0.0
    %169 = vmatpush1.xpose.msra.mxu0 0.0
    %170 = vmatprep.subr.mxu0 0.0
    %171 = vmatpush1.xpose.msra.mxu0 0.0
    %172 = vmatprep.subr.mxu0 0.0
    %173 = vmatpush1.xpose.msra.mxu0 0.0
    %174 = vmatprep.subr.mxu0 0.0
    %175 = vmatpush1.xpose.msra.mxu0 0.0
    %176 = vmatprep.subr.mxu0 0.0
    %177 = vmatpush1.xpose.msra.mxu0 0.0
    %178 = vmatprep.subr.mxu0 0.0
    %179 = vmatpush1.xpose.msra.mxu0 0.0
    %180 = vmatprep.subr.mxu0 0.0
    %181 = vmatpush1.xpose.msra.mxu0 0.0
    %182 = vmatprep.subr.mxu0 0.0
    %183 = vmatpush1.xpose.msra.mxu0 0.0
    %184 = vmatprep.subr.mxu0 0.0
    %185 = vmatpush1.xpose.msra.mxu0 0.0
    %186 = vmatprep.subr.mxu0 0.0
    %187 = vmatpush1.xpose.msra.mxu0 0.0
    %188 = vmatprep.subr.mxu0 0.0
    %189 = vmatpush1.xpose.msra.mxu0 0.0
    %190 = vmatprep.subr.mxu0 0.0
    %191 = vmatpush1.xpose.msra.mxu0 0.0
    %192 = vmatprep.subr.mxu0 0.0
    %193 = vmatpush1.xpose.msra.mxu0 0.0
    %v194 = vand.u32 %v36, 4294901760
    %195 = vmatprep.mubr.f32.mxu0 %v194
    %v196 = vand.u32 %v33, 4294901760
    %197 = vmatmul.mubr.f32.gmra.mrb[0].mxu0 %v196
    %v198 = vpop.f32.mrb[0].mxu0
    %v199 = vadd.f32 %v117, %v198
    %v200 = vpop.f32.mrb[0].mxu0
    %201 = vdwg.mxu0
    %v202 = vand.u32 %v36, 4294901760
    %v203 = vsub.f32 %v36, %v202
    %204 = vmatprep.subr.mxu0 %v203
    %v205 = vand.u32 %v33, 4294901760
    %v206 = vsub.f32 %v33, %v205
    %207 = vmatpush1.xpose.msra.mxu0 %v206
    %208 = vmatprep.subr.mxu0 0.0
    %209 = vmatpush1.xpose.msra.mxu0 0.0
    %210 = vmatprep.subr.mxu0 0.0
    %211 = vmatpush1.xpose.msra.mxu0 0.0
    %212 = vmatprep.subr.mxu0 0.0
    %213 = vmatpush1.xpose.msra.mxu0 0.0
    %214 = vmatprep.subr.mxu0 0.0
    %215 = vmatpush1.xpose.msra.mxu0 0.0
    %216 = vmatprep.subr.mxu0 0.0
    %217 = vmatpush1.xpose.msra.mxu0 0.0
    %218 = vmatprep.subr.mxu0 0.0
    %219 = vmatpush1.xpose.msra.mxu0 0.0
    %220 = vmatprep.subr.mxu0 0.0
    %221 = vmatpush1.xpose.msra.mxu0 0.0
    %222 = vmatprep.subr.mxu0 0.0
    %223 = vmatpush1.xpose.msra.mxu0 0.0
    %224 = vmatprep.subr.mxu0 0.0
    %225 = vmatpush1.xpose.msra.mxu0 0.0
    %226 = vmatprep.subr.mxu0 0.0
    %227 = vmatpush1.xpose.msra.mxu0 0.0
    %228 = vmatprep.subr.mxu0 0.0
    %229 = vmatpush1.xpose.msra.mxu0 0.0
    %230 = vmatprep.subr.mxu0 0.0
    %231 = vmatpush1.xpose.msra.mxu0 0.0
    %232 = vmatprep.subr.mxu0 0.0
    %233 = vmatpush1.xpose.msra.mxu0 0.0
    %234 = vmatprep.subr.mxu0 0.0
    %235 = vmatpush1.xpose.msra.mxu0 0.0
    %236 = vmatprep.subr.mxu0 0.0
    %237 = vmatpush1.xpose.msra.mxu0 0.0
    %238 = vmatprep.subr.mxu0 0.0
    %239 = vmatpush1.xpose.msra.mxu0 0.0
    %240 = vmatprep.subr.mxu0 0.0
    %241 = vmatpush1.xpose.msra.mxu0 0.0
    %242 = vmatprep.subr.mxu0 0.0
    %243 = vmatpush1.xpose.msra.mxu0 0.0
    %244 = vmatprep.subr.mxu0 0.0
    %245 = vmatpush1.xpose.msra.mxu0 0.0
    %246 = vmatprep.subr.mxu0 0.0
    %247 = vmatpush1.xpose.msra.mxu0 0.0
    %248 = vmatprep.subr.mxu0 0.0
    %249 = vmatpush1.xpose.msra.mxu0 0.0
    %250 = vmatprep.subr.mxu0 0.0
    %251 = vmatpush1.xpose.msra.mxu0 0.0
    %252 = vmatprep.subr.mxu0 0.0
    %253 = vmatpush1.xpose.msra.mxu0 0.0
    %254 = vmatprep.subr.mxu0 0.0
    %255 = vmatpush1.xpose.msra.mxu0 0.0
    %256 = vmatprep.subr.mxu0 0.0
    %257 = vmatpush1.xpose.msra.mxu0 0.0
    %258 = vmatprep.subr.mxu0 0.0
    %259 = vmatpush1.xpose.msra.mxu0 0.0
    %260 = vmatprep.subr.mxu0 0.0
    %261 = vmatpush1.xpose.msra.mxu0 0.0
    %262 = vmatprep.subr.mxu0 0.0
    %263 = vmatpush1.xpose.msra.mxu0 0.0
    %264 = vmatprep.subr.mxu0 0.0
    %265 = vmatpush1.xpose.msra.mxu0 0.0
    %266 = vmatprep.subr.mxu0 0.0
    %267 = vmatpush1.xpose.msra.mxu0 0.0
    %268 = vmatprep.subr.mxu0 0.0
    %269 = vmatpush1.xpose.msra.mxu0 0.0
    %v270 = vand.u32 %v36, 4294901760
    %v271 = vsub.f32 %v36, %v270
    %272 = vmatprep.mubr.f32.mxu0 %v271
    %v273 = vand.u32 %v33, 4294901760
    %v274 = vsub.f32 %v33, %v273
    %275 = vmatmul.mubr.f32.gmra.mrb[0].mxu0 %v274
    %v276 = vpop.f32.mrb[0].mxu0
    %v277 = vadd.f32 %v199, %v276
    %v278 = vpop.f32.mrb[0].mxu0
    %279 = vdwg.mxu0
    %v280 = vand.u32 %v36, 4294901760
    %281 = vmatprep.subr.mxu0 %v280
    %v282 = vand.u32 %v33, 4294901760
    %283 = vmatpush1.xpose.msra.mxu0 %v282
    %284 = vmatprep.subr.mxu0 0.0
    %285 = vmatpush1.xpose.msra.mxu0 0.0
    %286 = vmatprep.subr.mxu0 0.0
    %287 = vmatpush1.xpose.msra.mxu0 0.0
    %288 = vmatprep.subr.mxu0 0.0
    %289 = vmatpush1.xpose.msra.mxu0 0.0
    %290 = vmatprep.subr.mxu0 0.0
    %291 = vmatpush1.xpose.msra.mxu0 0.0
    %292 = vmatprep.subr.mxu0 0.0
    %293 = vmatpush1.xpose.msra.mxu0 0.0
    %294 = vmatprep.subr.mxu0 0.0
    %295 = vmatpush1.xpose.msra.mxu0 0.0
    %296 = vmatprep.subr.mxu0 0.0
    %297 = vmatpush1.xpose.msra.mxu0 0.0
    %298 = vmatprep.subr.mxu0 0.0
    %299 = vmatpush1.xpose.msra.mxu0 0.0
    %300 = vmatprep.subr.mxu0 0.0
    %301 = vmatpush1.xpose.msra.mxu0 0.0
    %302 = vmatprep.subr.mxu0 0.0
    %303 = vmatpush1.xpose.msra.mxu0 0.0
    %304 = vmatprep.subr.mxu0 0.0
    %305 = vmatpush1.xpose.msra.mxu0 0.0
    %306 = vmatprep.subr.mxu0 0.0
    %307 = vmatpush1.xpose.msra.mxu0 0.0
    %308 = vmatprep.subr.mxu0 0.0
    %309 = vmatpush1.xpose.msra.mxu0 0.0
    %310 = vmatprep.subr.mxu0 0.0
    %311 = vmatpush1.xpose.msra.mxu0 0.0
    %312 = vmatprep.subr.mxu0 0.0
    %313 = vmatpush1.xpose.msra.mxu0 0.0
    %314 = vmatprep.subr.mxu0 0.0
    %315 = vmatpush1.xpose.msra.mxu0 0.0
    %316 = vmatprep.subr.mxu0 0.0
    %317 = vmatpush1.xpose.msra.mxu0 0.0
    %318 = vmatprep.subr.mxu0 0.0
    %319 = vmatpush1.xpose.msra.mxu0 0.0
    %320 = vmatprep.subr.mxu0 0.0
    %321 = vmatpush1.xpose.msra.mxu0 0.0
    %322 = vmatprep.subr.mxu0 0.0
    %323 = vmatpush1.xpose.msra.mxu0 0.0
    %324 = vmatprep.subr.mxu0 0.0
    %325 = vmatpush1.xpose.msra.mxu0 0.0
    %326 = vmatprep.subr.mxu0 0.0
    %327 = vmatpush1.xpose.msra.mxu0 0.0
    %328 = vmatprep.subr.mxu0 0.0
    %329 = vmatpush1.xpose.msra.mxu0 0.0
    %330 = vmatprep.subr.mxu0 0.0
    %331 = vmatpush1.xpose.msra.mxu0 0.0
    %332 = vmatprep.subr.mxu0 0.0
    %333 = vmatpush1.xpose.msra.mxu0 0.0
    %334 = vmatprep.subr.mxu0 0.0
    %335 = vmatpush1.xpose.msra.mxu0 0.0
    %336 = vmatprep.subr.mxu0 0.0
    %337 = vmatpush1.xpose.msra.mxu0 0.0
    %338 = vmatprep.subr.mxu0 0.0
    %339 = vmatpush1.xpose.msra.mxu0 0.0
    %340 = vmatprep.subr.mxu0 0.0
    %341 = vmatpush1.xpose.msra.mxu0 0.0
    %342 = vmatprep.subr.mxu0 0.0
    %343 = vmatpush1.xpose.msra.mxu0 0.0
    %344 = vmatprep.subr.mxu0 0.0
    %345 = vmatpush1.xpose.msra.mxu0 0.0
    %v346 = vand.u32 %v36, 4294901760
    %v347 = vsub.f32 %v36, %v346
    %v348 = vand.u32 %v347, 4294901760
    %349 = vmatprep.mubr.f32.mxu0 %v348
    %v350 = vand.u32 %v33, 4294901760
    %v351 = vsub.f32 %v33, %v350
    %v352 = vand.u32 %v351, 4294901760
    %353 = vmatmul.mubr.f32.gmra.mrb[0].mxu0 %v352
    %v354 = vpop.f32.mrb[0].mxu0
    %v355 = vadd.f32 %v277, %v354
    %v356 = vpop.f32.mrb[0].mxu0
    %357 = vdwg.mxu0
    %v358 = vand.u32 %v36, 4294901760
    %v359 = vsub.f32 %v36, %v358
    %v360 = vand.u32 %v359, 4294901760
    %361 = vmatprep.subr.mxu0 %v360
    %v362 = vand.u32 %v33, 4294901760
    %v363 = vsub.f32 %v33, %v362
    %v364 = vand.u32 %v363, 4294901760
    %365 = vmatpush1.xpose.msra.mxu0 %v364
    %366 = vmatprep.subr.mxu0 0.0
    %367 = vmatpush1.xpose.msra.mxu0 0.0
    %368 = vmatprep.subr.mxu0 0.0
    %369 = vmatpush1.xpose.msra.mxu0 0.0
    %370 = vmatprep.subr.mxu0 0.0
    %371 = vmatpush1.xpose.msra.mxu0 0.0
    %372 = vmatprep.subr.mxu0 0.0
    %373 = vmatpush1.xpose.msra.mxu0 0.0
    %374 = vmatprep.subr.mxu0 0.0
    %375 = vmatpush1.xpose.msra.mxu0 0.0
    %376 = vmatprep.subr.mxu0 0.0
    %377 = vmatpush1.xpose.msra.mxu0 0.0
    %378 = vmatprep.subr.mxu0 0.0
    %379 = vmatpush1.xpose.msra.mxu0 0.0
    %380 = vmatprep.subr.mxu0 0.0
    %381 = vmatpush1.xpose.msra.mxu0 0.0
    %382 = vmatprep.subr.mxu0 0.0
    %383 = vmatpush1.xpose.msra.mxu0 0.0
    %384 = vmatprep.subr.mxu0 0.0
    %385 = vmatpush1.xpose.msra.mxu0 0.0
    %386 = vmatprep.subr.mxu0 0.0
    %387 = vmatpush1.xpose.msra.mxu0 0.0
    %388 = vmatprep.subr.mxu0 0.0
    %389 = vmatpush1.xpose.msra.mxu0 0.0
    %390 = vmatprep.subr.mxu0 0.0
    %391 = vmatpush1.xpose.msra.mxu0 0.0
    %392 = vmatprep.subr.mxu0 0.0
    %393 = vmatpush1.xpose.msra.mxu0 0.0
    %394 = vmatprep.subr.mxu0 0.0
    %395 = vmatpush1.xpose.msra.mxu0 0.0
    %396 = vmatprep.subr.mxu0 0.0
    %397 = vmatpush1.xpose.msra.mxu0 0.0
    %398 = vmatprep.subr.mxu0 0.0
    %399 = vmatpush1.xpose.msra.mxu0 0.0
    %400 = vmatprep.subr.mxu0 0.0
    %401 = vmatpush1.xpose.msra.mxu0 0.0
    %402 = vmatprep.subr.mxu0 0.0
    %403 = vmatpush1.xpose.msra.mxu0 0.0
    %404 = vmatprep.subr.mxu0 0.0
    %405 = vmatpush1.xpose.msra.mxu0 0.0
    %406 = vmatprep.subr.mxu0 0.0
    %407 = vmatpush1.xpose.msra.mxu0 0.0
    %408 = vmatprep.subr.mxu0 0.0
    %409 = vmatpush1.xpose.msra.mxu0 0.0
    %410 = vmatprep.subr.mxu0 0.0
    %411 = vmatpush1.xpose.msra.mxu0 0.0
    %412 = vmatprep.subr.mxu0 0.0
    %413 = vmatpush1.xpose.msra.mxu0 0.0
    %414 = vmatprep.subr.mxu0 0.0
    %415 = vmatpush1.xpose.msra.mxu0 0.0
    %416 = vmatprep.subr.mxu0 0.0
    %417 = vmatpush1.xpose.msra.mxu0 0.0
    %418 = vmatprep.subr.mxu0 0.0
    %419 = vmatpush1.xpose.msra.mxu0 0.0
    %420 = vmatprep.subr.mxu0 0.0
    %421 = vmatpush1.xpose.msra.mxu0 0.0
    %422 = vmatprep.subr.mxu0 0.0
    %423 = vmatpush1.xpose.msra.mxu0 0.0
    %424 = vmatprep.subr.mxu0 0.0
    %425 = vmatpush1.xpose.msra.mxu0 0.0
    %426 = vmatprep.subr.mxu0 0.0
    %427 = vmatpush1.xpose.msra.mxu0 0.0
    %v428 = vand.u32 %v36, 4294901760
    %429 = vmatprep.mubr.f32.mxu0 %v428
    %v430 = vand.u32 %v33, 4294901760
    %431 = vmatmul.mubr.f32.gmra.mrb[0].mxu0 %v430
    %v432 = vpop.f32.mrb[0].mxu0
    %v433 = vadd.f32 %v355, %v432
    %v434 = vpop.f32.mrb[0].mxu0
    %435 = vdwg.mxu0
    %v436 = vand.u32 %v36, 4294901760
    %437 = vmatprep.subr.mxu0 %v436
    %v438 = vand.u32 %v33, 4294901760
    %439 = vmatpush1.xpose.msra.mxu0 %v438
    %440 = vmatprep.subr.mxu0 0.0
    %441 = vmatpush1.xpose.msra.mxu0 0.0
    %442 = vmatprep.subr.mxu0 0.0
    %443 = vmatpush1.xpose.msra.mxu0 0.0
    %444 = vmatprep.subr.mxu0 0.0
    %445 = vmatpush1.xpose.msra.mxu0 0.0
    %446 = vmatprep.subr.mxu0 0.0
    %447 = vmatpush1.xpose.msra.mxu0 0.0
    %448 = vmatprep.subr.mxu0 0.0
    %449 = vmatpush1.xpose.msra.mxu0 0.0
    %450 = vmatprep.subr.mxu0 0.0
    %451 = vmatpush1.xpose.msra.mxu0 0.0
    %452 = vmatprep.subr.mxu0 0.0
    %453 = vmatpush1.xpose.msra.mxu0 0.0
    %454 = vmatprep.subr.mxu0 0.0
    %455 = vmatpush1.xpose.msra.mxu0 0.0
    %456 = vmatprep.subr.mxu0 0.0
    %457 = vmatpush1.xpose.msra.mxu0 0.0
    %458 = vmatprep.subr.mxu0 0.0
    %459 = vmatpush1.xpose.msra.mxu0 0.0
    %460 = vmatprep.subr.mxu0 0.0
    %461 = vmatpush1.xpose.msra.mxu0 0.0
    %462 = vmatprep.subr.mxu0 0.0
    %463 = vmatpush1.xpose.msra.mxu0 0.0
    %464 = vmatprep.subr.mxu0 0.0
    %465 = vmatpush1.xpose.msra.mxu0 0.0
    %466 = vmatprep.subr.mxu0 0.0
    %467 = vmatpush1.xpose.msra.mxu0 0.0
    %468 = vmatprep.subr.mxu0 0.0
    %469 = vmatpush1.xpose.msra.mxu0 0.0
    %470 = vmatprep.subr.mxu0 0.0
    %471 = vmatpush1.xpose.msra.mxu0 0.0
    %472 = vmatprep.subr.mxu0 0.0
    %473 = vmatpush1.xpose.msra.mxu0 0.0
    %474 = vmatprep.subr.mxu0 0.0
    %475 = vmatpush1.xpose.msra.mxu0 0.0
    %476 = vmatprep.subr.mxu0 0.0
    %477 = vmatpush1.xpose.msra.mxu0 0.0
    %478 = vmatprep.subr.mxu0 0.0
    %479 = vmatpush1.xpose.msra.mxu0 0.0
    %480 = vmatprep.subr.mxu0 0.0
    %481 = vmatpush1.xpose.msra.mxu0 0.0
    %482 = vmatprep.subr.mxu0 0.0
    %483 = vmatpush1.xpose.msra.mxu0 0.0
    %484 = vmatprep.subr.mxu0 0.0
    %485 = vmatpush1.xpose.msra.mxu0 0.0
    %486 = vmatprep.subr.mxu0 0.0
    %487 = vmatpush1.xpose.msra.mxu0 0.0
    %488 = vmatprep.subr.mxu0 0.0
    %489 = vmatpush1.xpose.msra.mxu0 0.0
    %490 = vmatprep.subr.mxu0 0.0
    %491 = vmatpush1.xpose.msra.mxu0 0.0
    %492 = vmatprep.subr.mxu0 0.0
    %493 = vmatpush1.xpose.msra.mxu0 0.0
    %494 = vmatprep.subr.mxu0 0.0
    %495 = vmatpush1.xpose.msra.mxu0 0.0
    %496 = vmatprep.subr.mxu0 0.0
    %497 = vmatpush1.xpose.msra.mxu0 0.0
    %498 = vmatprep.subr.mxu0 0.0
    %499 = vmatpush1.xpose.msra.mxu0 0.0
    %500 = vmatprep.subr.mxu0 0.0
    %501 = vmatpush1.xpose.msra.mxu0 0.0
    %v502 = vand.u32 %v36, 4294901760
    %503 = vmatprep.mubr.f32.mxu0 %v502
    %v504 = vand.u32 %v33, 4294901760
    %505 = vmatmul.mubr.f32.gmra.mrb[0].mxu0 %v504
    %v506 = vpop.f32.mrb[0].mxu0
    %v507 = vadd.f32 %v433, %v506
    %v508 = vpop.f32.mrb[0].mxu0
    %509 = vdwg.mxu0
    %v510 = vadd.f32 %v34, %v507
    %vm511 = vcmask 27648
    %512 = vst.msk [vmem:[#allocation5] sm:$0xf] %vm511, %v510
    // Predicated region
    $region14: #{tpu_custom_call.1} parent=1 // pred_check
      _
    $region15: #{tpu_custom_call.1} parent=1 // pred_check_branch
      %514 = sbr.rel (0) target = $region17
    $region16: #{tpu_custom_call.1} parent=1 // pred_region
      %s516 = ssub.s32 64, 64
      %517 = vsyncadd [#allocation4], %s516
      %s519 = sshll.u32 [#allocation5], 4
      %s520 = int_to_ptr.vmem [resolvable:$true] %s519
      %522 = dma.vmem_to_hbm [thread:$0]  %s520, 64, %s1, [#allocation4]
    $region17: #{tpu_custom_call.1} parent=1 // pred_fallthru
      _
    // Predicated region
    $region18: #{tpu_custom_call.1} parent=1 // pred_check
      _
    $region19: #{tpu_custom_call.1} parent=1 // pred_check_branch
      %524 = sbr.rel (0) target = $region21
    $region20: #{tpu_custom_call.1} parent=1 // pred_region
      %525 = dma.done [#allocation4], 64
    $region21: #{tpu_custom_call.1} parent=1 // pred_fallthru
      _
    %526 = vsyncpa [#allocation3], 1
    %527 = vsyncpa [#allocation4], 1

</llo_original>
